<compile_context>
chip_gen: v5e
topology: v5e:2x2
jax: 0.10.0
libtpu: 0.0.40
codegen_flags: <defaults>
</compile_context>

<pallas_src>
import jax
import jax.numpy as jnp
from jax.experimental import pallas as pl
from jax.experimental.pallas import tpu as pltpu


_SQRT_2_OVER_PI = 0.7978845608028654


def _gelu_tanh(x):
    # GELU, tanh approximation (f32 math on VPU + EUP).
    return 0.5 * x * (1.0 + jnp.tanh(_SQRT_2_OVER_PI * (x + 0.044715 * x * x * x)))


def mlp_kernel(x_ref, w1_ref, b1_ref, w2_ref, b2_ref, o_ref, acc_ref):
    # Grid = (M tiles [parallel], H tiles [arbitrary / reduction, last]).
    j = pl.program_id(1)

    @pl.when(j == 0)
    def _():
        acc_ref[...] = jnp.zeros_like(acc_ref)

    cdt = w1_ref.dtype                                   # bf16 fast path / f32 path
    x = x_ref[...].astype(cdt)
    h = jnp.dot(x, w1_ref[...], preferred_element_type=jnp.float32)       # MXU
    h = h + b1_ref[...]                                  # f32 bias
    h = _gelu_tanh(h)                                    # f32 (VPU + EUP)
    # Dropout(p=0.0) / eval mode -> identity, skipped.
    acc_ref[...] += jnp.dot(h.astype(cdt), w2_ref[...],
                            preferred_element_type=jnp.float32)           # MXU

    @pl.when(j == pl.num_programs(1) - 1)
    def _():
        o_ref[...] = (acc_ref[...] + b2_ref[...]).astype(o_ref.dtype)


def mlp_forward(x, w1, b1, w2, b2, *, tm=512, th=512,
                compute_dtype=jnp.bfloat16,
                vmem_limit_bytes=64 * 1024 * 1024):
    """Fused MLP forward: GELU(x @ w1 + b1) @ w2 + b2.

    x  : (..., Din)
    w1 : (Din, H)     (already transposed vs torch's (H, Din) layout)
    b1 : (H,)
    w2 : (H, Dout)
    b2 : (Dout,)
    compute_dtype: dtype for the MXU operands (bf16 recommended; None = keep
                   the weights' dtype).  Bias/GELU/accumulation stay f32.
    returns (..., Dout) in x.dtype
    """
    *lead, d_in = x.shape
    d_hidden = w1.shape[1]
    d_out = w2.shape[1]
    assert w1.shape[0] == d_in and w2.shape[0] == d_hidden
    assert b1.shape == (d_hidden,) and b2.shape == (d_out,)

    m = 1
    for s in lead:
        m *= s
    x2 = x.reshape(m, d_in)

    # ---- row tile (M): multiples of 128 fill the MXU; tiny M -> multiples of 8.
    tm = int(tm)
    if m >= 128:
        tm = max(128, (min(tm, ((m + 127) // 128) * 128) // 128) * 128)
        # Keep >=2 M tiles so the "parallel" axis can shard across both
        # TensorCores on v7x.
        if pl.cdiv(m, tm) < 2 and m > 256:
            tm = max(128, ((pl.cdiv(m, 2) + 127) // 128) * 128)
    else:
        tm = max(8, min((tm // 8) * 8, ((m + 7) // 8) * 8))

    # ---- hidden tile (H): must be a multiple of 128 (lane width) or the full
    # hidden dim.  If H isn't a multiple of TH, zero-pad the (small, weight-side)
    # hidden dim once so padded slices contribute exactly zero to the accumulator.
    th = int(th)
    if d_hidden < 128:
        th = d_hidden
    else:
        th = max(128, (min(th, d_hidden) // 128) * 128)
    h_pad = th * pl.cdiv(d_hidden, th)
    if h_pad != d_hidden:
        # TODO(synk): pre-pad (and pre-cast) the weights once at init time to
        # avoid redoing this small pad on every call.
        w1 = jnp.pad(w1, ((0, 0), (0, h_pad - d_hidden)))
        b1 = jnp.pad(b1, ((0, h_pad - d_hidden),))
        w2 = jnp.pad(w2, ((0, h_pad - d_hidden), (0, 0)))

    # bf16 weights -> bf16 MXU path (>=2x throughput on v5e/v6e/v7x, half the
    # weight DMA / VMEM).  Biases stay f32 for the f32 epilogue.
    if compute_dtype is not None:
        w1 = w1.astype(compute_dtype)
        w2 = w2.astype(compute_dtype)
    b1 = b1.astype(jnp.float32)
    b2 = b2.astype(jnp.float32)

    grid = (pl.cdiv(m, tm), h_pad // th)

    out = pl.pallas_call(
        mlp_kernel,
        out_shape=jax.ShapeDtypeStruct((m, d_out), x.dtype),
        grid=grid,
        in_specs=[
            pl.BlockSpec((tm, d_in), lambda i, j: (i, 0)),       # x tile (reused across j)
            pl.BlockSpec((d_in, th), lambda i, j: (0, j)),       # w1 hidden-slice (streams)
            pl.BlockSpec((1, th), lambda i, j: (0, j)),          # b1 hidden-slice
            pl.BlockSpec((th, d_out), lambda i, j: (j, 0)),      # w2 hidden-slice (streams)
            pl.BlockSpec((1, d_out), lambda i, j: (0, 0)),       # b2 (resident)
        ],
        out_specs=pl.BlockSpec((tm, d_out), lambda i, j: (i, 0)),  # lane-dense output
        scratch_shapes=[pltpu.VMEM((tm, d_out), jnp.float32)],     # f32 accumulator
        compiler_params=pltpu.CompilerParams(
            dimension_semantics=("parallel", "arbitrary"),
            vmem_limit_bytes=vmem_limit_bytes,   # <= physical on v5e/v6e/v7x; H-tiling keeps usage small
        ),
    )(x2, w1, b1.reshape(1, h_pad), w2, b2.reshape(1, d_out))

    return out.reshape(*lead, d_out)


if __name__ == "__main__":
    # Small shapes consistent with the module: x (batch=2, seq=9, in_features=32),
    # hidden_features=64, out_features=32.  seq=9 with tm=8 exercises the
    # multi-tile grid (grid=(3, 1)) and the ragged (masked-writeback) last block.
    B, S, D_IN, H, D_OUT = 2, 9, 32, 64, 32

    key = jax.random.PRNGKey(0)
    k1, k2, k3, k4, k5 = jax.random.split(key, 5)
    x = jax.random.normal(k1, (B, S, D_IN), dtype=jnp.float32)
    w1 = jax.random.normal(k2, (D_IN, H), dtype=jnp.float32) * (1.0 / (D_IN ** 0.5))
    b1 = jax.random.normal(k3, (H,), dtype=jnp.float32) * 0.01
    w2 = jax.random.normal(k4, (H, D_OUT), dtype=jnp.float32) * (1.0 / (H ** 0.5))
    b2 = jax.random.normal(k5, (D_OUT,), dtype=jnp.float32) * 0.01

    # Pure-JAX f32 reference (same tanh-GELU formulation).
    h_ref = x @ w1 + b1
    h_ref = 0.5 * h_ref * (1.0 + jnp.tanh(_SQRT_2_OVER_PI * (h_ref + 0.044715 * h_ref ** 3)))
    ref = h_ref @ w2 + b2

    # 1) f32 MXU path -> tight tolerance against the f32 reference.
    out_f32 = mlp_forward(x, w1, b1, w2, b2, tm=8, compute_dtype=jnp.float32)
    out_f32 = jax.block_until_ready(out_f32)
    assert out_f32.shape == (B, S, D_OUT), out_f32.shape
    assert jnp.allclose(out_f32, ref, atol=1e-4, rtol=1e-4), (
        float(jnp.max(jnp.abs(out_f32 - ref))))

    # 2) default bf16 MXU path -> bf16 operand rounding (f32 accumulation),
    #    looser tolerance against the f32 reference.
    out_bf16 = mlp_forward(x, w1, b1, w2, b2, tm=8)
    out_bf16 = jax.block_until_ready(out_bf16)
    assert out_bf16.shape == (B, S, D_OUT), out_bf16.shape
    assert jnp.allclose(out_bf16, ref, atol=3e-2, rtol=3e-2), (
        float(jnp.max(jnp.abs(out_bf16 - ref))))

    print("KERNEL_OK")
</pallas_src>

<mosaic_0001>
module attributes {stable_mosaic.version = 11 : i64} {
  func.func @mlp_kernel(%arg0: i32, %arg1: i32, %arg2: memref<8x32xf32, #tpu.memory_space<vmem>>, %arg3: memref<32x64xf32, #tpu.memory_space<vmem>>, %arg4: memref<1x64xf32, #tpu.memory_space<vmem>>, %arg5: memref<64x32xf32, #tpu.memory_space<vmem>>, %arg6: memref<1x32xf32, #tpu.memory_space<vmem>>, %arg7: memref<8x32xf32, #tpu.memory_space<vmem>>, %arg8: memref<8x32xf32, #tpu.memory_space<vmem>>) attributes {dimension_semantics = [#tpu.dimension_semantics<parallel>, #tpu.dimension_semantics<arbitrary>], iteration_bounds = array<i64: 3, 1>, scalar_prefetch = 0 : i64, scratch_operands = 1 : i64, tpu.core_type = #tpu.core_type<tc>, window_params = [{transform_indices = @transform_0, window_bounds = array<i64: 8, 32>}, {transform_indices = @transform_1, window_bounds = array<i64: 32, 64>}, {transform_indices = @transform_2, window_bounds = array<i64: 1, 64>}, {transform_indices = @transform_3, window_bounds = array<i64: 64, 32>}, {pipeline_mode = #tpu.pipeline_mode<synchronous>, transform_indices = @transform_4, window_bounds = array<i64: 1, 32>}, {transform_indices = @transform_5, window_bounds = array<i64: 8, 32>}]} {
    %c0_i32 = arith.constant 0 : i32
    %0 = arith.cmpi eq, %arg1, %c0_i32 : i32
    %1 = arith.extui %0 : i1 to i32
    %c0_i32_0 = arith.constant 0 : i32
    %2 = arith.cmpi ne, %1, %c0_i32_0 : i32
    scf.if %2 {
      %cst_19 = arith.constant 0.000000e+00 : f32
      %30 = vector.broadcast %cst_19 : f32 to vector<8x32xf32>
      %c0_20 = arith.constant 0 : index
      %c0_21 = arith.constant 0 : index
      %31 = vector.load %arg8[%c0_20, %c0_21] : memref<8x32xf32, #tpu.memory_space<vmem>>, vector<8x32xf32>
      tpu.vector_store %arg8[%c0_20, %c0_21], %30 {strides = array<i32>} : memref<8x32xf32, #tpu.memory_space<vmem>>, vector<8x32xf32>,
    } else {
    }
    %c0 = arith.constant 0 : index
    %c0_1 = arith.constant 0 : index
    %3 = vector.load %arg2[%c0, %c0_1] : memref<8x32xf32, #tpu.memory_space<vmem>>, vector<8x32xf32>
    %c0_2 = arith.constant 0 : index
    %c0_3 = arith.constant 0 : index
    %4 = vector.load %arg3[%c0_2, %c0_3] : memref<32x64xf32, #tpu.memory_space<vmem>>, vector<32x64xf32>
    %cst = arith.constant dense<0.000000e+00> : vector<8x64xf32>
    %5 = tpu.matmul %3, %4, %cst {dimension_numbers = #tpu.dot_dimension_numbers<[1], [0], [0], [1], [0, 0, 1, 1], [], []>} : vector<8x32xf32>, vector<32x64xf32>, vector<8x64xf32> -> vector<8x64xf32>
    %c0_4 = arith.constant 0 : index
    %c0_5 = arith.constant 0 : index
    %6 = vector.load %arg4[%c0_4, %c0_5] : memref<1x64xf32, #tpu.memory_space<vmem>>, vector<1x64xf32>
    %7 = vector.broadcast %6 : vector<1x64xf32> to vector<8x64xf32>
    %8 = arith.addf %5, %7 : vector<8x64xf32>
    %cst_6 = arith.constant 5.000000e-01 : f32
    %9 = vector.broadcast %cst_6 : f32 to vector<8x64xf32>
    %10 = arith.mulf %9, %8 : vector<8x64xf32>
    %cst_7 = arith.constant 4.471500e-02 : f32
    %11 = vector.broadcast %cst_7 : f32 to vector<8x64xf32>
    %12 = arith.mulf %11, %8 : vector<8x64xf32>
    %13 = arith.mulf %12, %8 : vector<8x64xf32>
    %14 = arith.mulf %13, %8 : vector<8x64xf32>
    %15 = arith.addf %8, %14 : vector<8x64xf32>
    %cst_8 = arith.constant 0.797884583 : f32
    %16 = vector.broadcast %cst_8 : f32 to vector<8x64xf32>
    %17 = arith.mulf %16, %15 : vector<8x64xf32>
    %18 = math.tanh %17 : vector<8x64xf32>
    %cst_9 = arith.constant 1.000000e+00 : f32
    %19 = vector.broadcast %cst_9 : f32 to vector<8x64xf32>
    %20 = arith.addf %19, %18 : vector<8x64xf32>
    %21 = arith.mulf %10, %20 : vector<8x64xf32>
    %c0_10 = arith.constant 0 : index
    %c0_11 = arith.constant 0 : index
    %22 = vector.load %arg8[%c0_10, %c0_11] : memref<8x32xf32, #tpu.memory_space<vmem>>, vector<8x32xf32>
    %c0_12 = arith.constant 0 : index
    %c0_13 = arith.constant 0 : index
    %23 = vector.load %arg5[%c0_12, %c0_13] : memref<64x32xf32, #tpu.memory_space<vmem>>, vector<64x32xf32>
    %cst_14 = arith.constant dense<0.000000e+00> : vector<8x32xf32>
    %24 = tpu.matmul %21, %23, %cst_14 {dimension_numbers = #tpu.dot_dimension_numbers<[1], [0], [0], [1], [0, 0, 1, 1], [], []>} : vector<8x64xf32>, vector<64x32xf32>, vector<8x32xf32> -> vector<8x32xf32>
    %25 = arith.addf %22, %24 : vector<8x32xf32>
    %c0_15 = arith.constant 0 : index
    %c0_16 = arith.constant 0 : index
    %26 = vector.load %arg8[%c0_15, %c0_16] : memref<8x32xf32, #tpu.memory_space<vmem>>, vector<8x32xf32>
    tpu.vector_store %arg8[%c0_15, %c0_16], %25 {strides = array<i32>} : memref<8x32xf32, #tpu.memory_space<vmem>>, vector<8x32xf32>,
    %c0_i32_17 = arith.constant 0 : i32
    %27 = arith.cmpi eq, %arg1, %c0_i32_17 : i32
    %28 = arith.extui %27 : i1 to i32
    %c0_i32_18 = arith.constant 0 : i32
    %29 = arith.cmpi ne, %28, %c0_i32_18 : i32
    scf.if %29 {
      %c0_19 = arith.constant 0 : index
      %c0_20 = arith.constant 0 : index
      %30 = vector.load %arg8[%c0_19, %c0_20] : memref<8x32xf32, #tpu.memory_space<vmem>>, vector<8x32xf32>
      %c0_21 = arith.constant 0 : index
      %c0_22 = arith.constant 0 : index
      %31 = vector.load %arg6[%c0_21, %c0_22] : memref<1x32xf32, #tpu.memory_space<vmem>>, vector<1x32xf32>
      %32 = vector.broadcast %31 : vector<1x32xf32> to vector<8x32xf32>
      %33 = arith.addf %30, %32 : vector<8x32xf32>
      %c0_23 = arith.constant 0 : index
      %c0_24 = arith.constant 0 : index
      %34 = vector.load %arg7[%c0_23, %c0_24] : memref<8x32xf32, #tpu.memory_space<vmem>>, vector<8x32xf32>
      tpu.vector_store %arg7[%c0_23, %c0_24], %33 {strides = array<i32>} : memref<8x32xf32, #tpu.memory_space<vmem>>, vector<8x32xf32>,
    } else {
    }
    return
  }
  func.func @transform_0(%arg0: i32, %arg1: i32) -> (i32, i32) {
    %c0_i32 = arith.constant 0 : i32
    %c0_i32_0 = arith.constant 0 : i32
    return %arg0, %c0_i32 : i32, i32
  }
  func.func @transform_1(%arg0: i32, %arg1: i32) -> (i32, i32) {
    %c0_i32 = arith.constant 0 : i32
    %c0_i32_0 = arith.constant 0 : i32
    return %c0_i32, %arg1 : i32, i32
  }
  func.func @transform_2(%arg0: i32, %arg1: i32) -> (i32, i32) {
    %c0_i32 = arith.constant 0 : i32
    %c0_i32_0 = arith.constant 0 : i32
    return %c0_i32, %arg1 : i32, i32
  }
  func.func @transform_3(%arg0: i32, %arg1: i32) -> (i32, i32) {
    %c0_i32 = arith.constant 0 : i32
    %c0_i32_0 = arith.constant 0 : i32
    return %arg1, %c0_i32 : i32, i32
  }
  func.func @transform_4(%arg0: i32, %arg1: i32) -> (i32, i32) {
    %c0_i32 = arith.constant 0 : i32
    %c0_i32_0 = arith.constant 0 : i32
    %c0_i32_1 = arith.constant 0 : i32
    return %c0_i32, %c0_i32_0 : i32, i32
  }
  func.func @transform_5(%arg0: i32, %arg1: i32) -> (i32, i32) {
    %c0_i32 = arith.constant 0 : i32
    %c0_i32_0 = arith.constant 0 : i32
    return %arg0, %c0_i32 : i32, i32
  }
}

</mosaic_0001>

<llo_original>
// kernel: tpu_custom_call.1
$region0: #{tpu_custom_call.1}
  #allocation0 [shape = 'u32[]', space=smem, size = 0x4, offset = 0x4, fixed_abs, tag = 'smem constant byte address 0x4 - core index']
  #allocation1 [shape = 'u32[72,128]{1,0:T(1,128)}', space=vmem, size = 0x9000, scoped, tag = 'internal scratch']
  #allocation2 [shape = 'f32[8,32]{1,0:T(8,128)}', space=vmem, size = 0x1000, scoped, tag = 'scratch operand']
  %s0 = inlined_call_operand.vmem [shape: f32[18,32], index: 0, kind: input, shape index: {}]
  %s1 = inlined_call_operand.vmem [shape: f32[32,64], index: 1, kind: input, shape index: {}]
  %s2 = inlined_call_operand.vmem [shape: f32[1,64], index: 2, kind: input, shape index: {}]
  %s3 = inlined_call_operand.vmem [shape: f32[64,32], index: 3, kind: input, shape index: {}]
  %s4 = inlined_call_operand.vmem [shape: f32[1,32], index: 4, kind: input, shape index: {}]
  %s5 = inlined_call_operand.hbm [shape: f32[18,32], index: 5, kind: output, shape index: {}]
  %s6 = sld [smem:[#allocation0]]
  $region61: #{tpu_custom_call.1} parent=0
    _
  %s8 = ssub.s32 1, %s6
  %s9 = scalar_select 0, %s8, %s6
  $region1: #{tpu_custom_call.1} parent=0
    #allocation3 [shape = 'u8[8192]{0}', space=vmem, size = 0x2000, scoped, tag = 'output window, operand 0']
    #allocation4 [shape = 's32[2]{0}', space=sflag, size = 0x8, scoped, tag = 'scoped memory for tpu_custom_call.1']
    %10 = vsyncpa [#allocation4], 0
    %s11 = scalar_lea.sflag [#allocation4], 1
    %12 = vsyncpa %s11, 0
    loop: start=0, step=1, limit=5
    $region2: #{tpu_custom_call.1} parent=1 // loop_pre_header
      _
    $region3: #{tpu_custom_call.1} parent=1 // loop_header
      %s14 = sphi 0, %s18
      %p15 = scmp.ge.s32.totalorder %s14, 5
      %s21 = sphi 0, %s33
      %s22 = sphi 0, %s29
      %s23 = sphi 0, %s21
      %s24 = sphi 0, %s22
      %s25 = sphi 0, %s23
      %s26 = sphi 0, %s24
      %s36 = sphi 0, %s38
      %s39 = sphi 0, %s36
      %s40 = sphi 0, %s39
      %s56 = sphi 0, %s40
      %s62 = sphi 0, %s64
      %s65 = sphi 0, %s62
      %s66 = sphi 0, %s65
      %s82 = sphi 0, %s66
      %s88 = sphi 0, %s90
      %s91 = sphi 0, %s88
      %s92 = sphi 0, %s91
      %s108 = sphi 0, %s92
      %s114 = sphi 0, %s116
      %s117 = sphi 0, %s114
      %s118 = sphi 0, %s117
      %s134 = sphi 0, %s118
      %s138 = sphi 0, %s138
      %s140 = sphi 0, %s138
      %s141 = sphi 0, %s140
      %s155 = sphi 0, %s141
      %s161 = sphi 0, %s163
      %s164 = sphi 0, %s161
      %s165 = sphi 0, %s164
      %s181 = sphi 0, %s165
    $region4: #{tpu_custom_call.1} parent=1 // loop_header_branch
      %17 = sbr.rel (%p15) target = $region8
    $region5: #{tpu_custom_call.1} parent=1 // loop_body
      %s19 = ssub.s32 %s14, 1
      %s20 = ssub.s32 %s14, 2
      %s27 = sadd.s32 1, %s22
      %p28 = scmp.ge.s32.totalorder %s27, 1
      %s29 = scalar_select %p28, 0, %s27
      %s30 = sadd.s32 1, %s21
      %s31 = scalar_select %p28, %s30, %s21
      %p32 = scmp.ge.s32.totalorder %s31, 3
      %s33 = scalar_select %p32, 0, %s31
      %s34 = ssub.s32 %s21, %s33
      %p35 = scmp.eq.s32.totalorder %s34, 0
      %s37 = sadd.s32 %s36, 1
      %s38 = scalar_select %p35, %s36, %s37
      %p41 = pneg %p35
      %p42 = scmp.eq.s32.totalorder %s14, 2
      %p43 = por %p41, %p42
      %p44 = scmp.ne.s32.totalorder %s36, %s39
      %p45 = scmp.eq.s32.totalorder %s14, 0
      %p46 = por %p44, %p45
      %p47 = scmp.ne.s32.totalorder %s36, %s39
      %p48 = scmp.eq.s32.totalorder %s19, 2
      %p49 = por %p47, %p48
      %p50 = scmp.ne.s32.totalorder %s39, %s40
      %p51 = scmp.eq.s32.totalorder %s19, 0
      %p52 = por %p50, %p51
      %p53 = scmp.ne.s32.totalorder %s39, %s40
      %p54 = scmp.eq.s32.totalorder %s20, 2
      %p55 = por %p53, %p54
      %p57 = scmp.ne.s32.totalorder %s40, %s56
      %p58 = scmp.eq.s32.totalorder %s20, 0
      %p59 = por %p57, %p58
      %s60 = ssub.s32 %s22, %s29
      %p61 = scmp.eq.s32.totalorder %s60, 0
      %s63 = sadd.s32 %s62, 1
      %s64 = scalar_select %p61, %s62, %s63
      %p67 = pneg %p61
      %p68 = scmp.eq.s32.totalorder %s14, 2
      %p69 = por %p67, %p68
      %p70 = scmp.ne.s32.totalorder %s62, %s65
      %p71 = scmp.eq.s32.totalorder %s14, 0
      %p72 = por %p70, %p71
      %p73 = scmp.ne.s32.totalorder %s62, %s65
      %p74 = scmp.eq.s32.totalorder %s19, 2
      %p75 = por %p73, %p74
      %p76 = scmp.ne.s32.totalorder %s65, %s66
      %p77 = scmp.eq.s32.totalorder %s19, 0
      %p78 = por %p76, %p77
      %p79 = scmp.ne.s32.totalorder %s65, %s66
      %p80 = scmp.eq.s32.totalorder %s20, 2
      %p81 = por %p79, %p80
      %p83 = scmp.ne.s32.totalorder %s66, %s82
      %p84 = scmp.eq.s32.totalorder %s20, 0
      %p85 = por %p83, %p84
      %s86 = ssub.s32 %s22, %s29
      %p87 = scmp.eq.s32.totalorder %s86, 0
      %s89 = sadd.s32 %s88, 1
      %s90 = scalar_select %p87, %s88, %s89
      %p93 = pneg %p87
      %p94 = scmp.eq.s32.totalorder %s14, 2
      %p95 = por %p93, %p94
      %p96 = scmp.ne.s32.totalorder %s88, %s91
      %p97 = scmp.eq.s32.totalorder %s14, 0
      %p98 = por %p96, %p97
      %p99 = scmp.ne.s32.totalorder %s88, %s91
      %p100 = scmp.eq.s32.totalorder %s19, 2
      %p101 = por %p99, %p100
      %p102 = scmp.ne.s32.totalorder %s91, %s92
      %p103 = scmp.eq.s32.totalorder %s19, 0
      %p104 = por %p102, %p103
      %p105 = scmp.ne.s32.totalorder %s91, %s92
      %p106 = scmp.eq.s32.totalorder %s20, 2
      %p107 = por %p105, %p106
      %p109 = scmp.ne.s32.totalorder %s92, %s108
      %p110 = scmp.eq.s32.totalorder %s20, 0
      %p111 = por %p109, %p110
      %s112 = ssub.s32 %s22, %s29
      %p113 = scmp.eq.s32.totalorder %s112, 0
      %s115 = sadd.s32 %s114, 1
      %s116 = scalar_select %p113, %s114, %s115
      %p119 = pneg %p113
      %p120 = scmp.eq.s32.totalorder %s14, 2
      %p121 = por %p119, %p120
      %p122 = scmp.ne.s32.totalorder %s114, %s117
      %p123 = scmp.eq.s32.totalorder %s14, 0
      %p124 = por %p122, %p123
      %p125 = scmp.ne.s32.totalorder %s114, %s117
      %p126 = scmp.eq.s32.totalorder %s19, 2
      %p127 = por %p125, %p126
      %p128 = scmp.ne.s32.totalorder %s117, %s118
      %p129 = scmp.eq.s32.totalorder %s19, 0
      %p130 = por %p128, %p129
      %p131 = scmp.ne.s32.totalorder %s117, %s118
      %p132 = scmp.eq.s32.totalorder %s20, 2
      %p133 = por %p131, %p132
      %p135 = scmp.ne.s32.totalorder %s118, %s134
      %p136 = scmp.eq.s32.totalorder %s20, 0
      %p137 = por %p135, %p136
      %s139 = sadd.s32 %s138, 1
      %p142 = scmp.eq.s32.totalorder %s14, 2
      %p143 = scmp.ne.s32.totalorder %s138, %s140
      %p144 = scmp.eq.s32.totalorder %s14, 0
      %p145 = por %p143, %p144
      %p146 = scmp.ne.s32.totalorder %s138, %s140
      %p147 = scmp.eq.s32.totalorder %s19, 2
      %p148 = por %p146, %p147
      %p149 = scmp.ne.s32.totalorder %s140, %s141
      %p150 = scmp.eq.s32.totalorder %s19, 0
      %p151 = por %p149, %p150
      %p152 = scmp.ne.s32.totalorder %s140, %s141
      %p153 = scmp.eq.s32.totalorder %s20, 2
      %p154 = por %p152, %p153
      %p156 = scmp.ne.s32.totalorder %s141, %s155
      %p157 = scmp.eq.s32.totalorder %s20, 0
      %p158 = por %p156, %p157
      %s159 = ssub.s32 %s21, %s33
      %p160 = scmp.eq.s32.totalorder %s159, 0
      %s162 = sadd.s32 %s161, 1
      %s163 = scalar_select %p160, %s161, %s162
      %p166 = pneg %p160
      %p167 = scmp.eq.s32.totalorder %s14, 2
      %p168 = por %p166, %p167
      %p169 = scmp.ne.s32.totalorder %s161, %s164
      %p170 = scmp.eq.s32.totalorder %s14, 0
      %p171 = por %p169, %p170
      %p172 = scmp.ne.s32.totalorder %s161, %s164
      %p173 = scmp.eq.s32.totalorder %s19, 2
      %p174 = por %p172, %p173
      %p175 = scmp.ne.s32.totalorder %s164, %s165
      %p176 = scmp.eq.s32.totalorder %s19, 0
      %p177 = por %p175, %p176
      %p178 = scmp.ne.s32.totalorder %s164, %s165
      %p179 = scmp.eq.s32.totalorder %s20, 2
      %p180 = por %p178, %p179
      %p182 = scmp.ne.s32.totalorder %s165, %s181
      %p183 = scmp.eq.s32.totalorder %s20, 0
      %p184 = por %p182, %p183
      %p185 = scmp.le.s32.totalorder 1, %s14
      %p186 = scmp.lt.s32.totalorder %s14, 4
      %p187 = pnand %p185, %p186
      %p188 = pneg %p187
      // Predicated region
      $region9: #{tpu_custom_call.1} parent=5 // pred_check
        _
      $region10: #{tpu_custom_call.1} parent=5 // pred_check_branch
        %190 = sbr.rel (%p187) target = $region12
      $region11: #{tpu_custom_call.1} parent=5 // pred_region
        %s191 = ssub.s32 %s14, 1
        // Predicated region
        $region13: #{tpu_custom_call.1} parent=11 // pred_check
          %p192 = pneg %p78
        $region14: #{tpu_custom_call.1} parent=11 // pred_check_branch
          %194 = sbr.rel (%p192) target = $region16
        $region15: #{tpu_custom_call.1} parent=11 // pred_region
          %p195 = scmp.lt.s32.totalorder %s24, 0
          %s196 = scalar_select %p195, %s24, 0
          %s197 = smul.addr %s196, 8
          %s198 = scalar_lea.vmem %s1, %s197
        $region16: #{tpu_custom_call.1} parent=11 // pred_fallthru
          _
        // Predicated region
        $region17: #{tpu_custom_call.1} parent=11 // pred_check
          %p199 = pneg %p104
        $region18: #{tpu_custom_call.1} parent=11 // pred_check_branch
          %201 = sbr.rel (%p199) target = $region20
        $region19: #{tpu_custom_call.1} parent=11 // pred_region
          %p202 = scmp.lt.s32.totalorder %s24, 0
          %s203 = scalar_select %p202, %s24, 0
          %s204 = scalar_lea.vmem %s2, %s203
        $region20: #{tpu_custom_call.1} parent=11 // pred_fallthru
          _
        // Predicated region
        $region21: #{tpu_custom_call.1} parent=11 // pred_check
          %p205 = pneg %p130
        $region22: #{tpu_custom_call.1} parent=11 // pred_check_branch
          %207 = sbr.rel (%p205) target = $region24
        $region23: #{tpu_custom_call.1} parent=11 // pred_region
          %s208 = smul.u32 8, %s24
          %p209 = scmp.lt.s32.totalorder %s208, 7
          %s210 = scalar_select %p209, %s208, 7
          %s211 = smul.addr %s210, 8
          %s212 = scalar_lea.vmem %s3, %s211
          %s213 = smul.u32 8, %s24
        $region24: #{tpu_custom_call.1} parent=11 // pred_fallthru
          _
        // Predicated region
        $region25: #{tpu_custom_call.1} parent=11 // pred_check
          %p214 = pneg %p151
        $region26: #{tpu_custom_call.1} parent=11 // pred_check_branch
          %216 = sbr.rel (%p214) target = $region28
        $region27: #{tpu_custom_call.1} parent=11 // pred_region
          _
        $region28: #{tpu_custom_call.1} parent=11 // pred_fallthru
          _
      $region12: #{tpu_custom_call.1} parent=5 // pred_fallthru
        _
      %p217 = scmp.lt.s32.totalorder %s14, 3
      // Predicated region
      $region29: #{tpu_custom_call.1} parent=5 // pred_check
        %p218 = pneg %p217
      $region30: #{tpu_custom_call.1} parent=5 // pred_check_branch
        %220 = sbr.rel (%p218) target = $region32
      $region31: #{tpu_custom_call.1} parent=5 // pred_region
        // Predicated region
        $region33: #{tpu_custom_call.1} parent=31 // pred_check
          %p221 = pneg %p46
        $region34: #{tpu_custom_call.1} parent=31 // pred_check_branch
          %223 = sbr.rel (%p221) target = $region36
        $region35: #{tpu_custom_call.1} parent=31 // pred_region
          %p224 = scmp.lt.s32.totalorder %s21, 2
          %s225 = scalar_select %p224, %s21, 2
          %s226 = smul.addr %s225, 8
          %s227 = scalar_lea.vmem %s0, %s226
        $region36: #{tpu_custom_call.1} parent=31 // pred_fallthru
          _
      $region32: #{tpu_custom_call.1} parent=5 // pred_fallthru
        _
      %p228 = scmp.le.s32.totalorder 1, %s14
      %p229 = scmp.lt.s32.totalorder %s14, 4
      %p230 = pnand %p228, %p229
      %p231 = pneg %p230
      // Predicated region
      $region37: #{tpu_custom_call.1} parent=5 // pred_check
        _
      $region38: #{tpu_custom_call.1} parent=5 // pred_check_branch
        %233 = sbr.rel (%p230) target = $region40
      $region39: #{tpu_custom_call.1} parent=5 // pred_region
        %s234 = ssub.s32 %s14, 1
        %p235 = scmp.lt.s32.totalorder %s23, 2
        %s236 = scalar_select %p235, %s23, 2
        %s237 = smul.addr %s236, 8
        %s238 = scalar_lea.vmem %s0, %s237
        %p239 = pneg %p52
        %p240 = pneg %p49
        %p241 = scmp.lt.s32.totalorder %s24, 0
        %s242 = scalar_select %p241, %s24, 0
        %s243 = smul.addr %s242, 8
        %s244 = scalar_lea.vmem %s1, %s243
        %p245 = pneg %p78
        %p246 = pneg %p75
        %p247 = scmp.lt.s32.totalorder %s24, 0
        %s248 = scalar_select %p247, %s24, 0
        %s249 = scalar_lea.vmem %s2, %s248
        %p250 = pneg %p104
        %p251 = pneg %p101
        %s252 = smul.u32 8, %s24
        %p253 = scmp.lt.s32.totalorder %s252, 7
        %s254 = scalar_select %p253, %s252, 7
        %s255 = smul.addr %s254, 8
        %s256 = scalar_lea.vmem %s3, %s255
        %p257 = pneg %p130
        %p258 = pneg %p127
        %p259 = pneg %p151
        %p260 = pneg %p148
        %p261 = pneg %p177
        %p262 = pneg %p174
        %s263 = sand.u32 %s164, 1
        %s264 = scalar_lea.sflag [#allocation4], %s263
        %s265 = sand.u32 %s164, 1
        %s266 = smul.addr %s265, 8
        %s267 = scalar_lea.vmem [#allocation3], %s266
        %p268 = scmp.lt.s32.totalorder %s23, 2
        %s269 = scalar_select %p268, %s23, 2
        %s270 = smul.addr %s269, 8
        %s271 = scalar_lea.vmem %s0, %s270
        %p272 = scmp.lt.s32.totalorder %s24, 0
        %s273 = scalar_select %p272, %s24, 0
        %s274 = smul.addr %s273, 8
        %s275 = scalar_lea.vmem %s1, %s274
        %p276 = scmp.lt.s32.totalorder %s24, 0
        %s277 = scalar_select %p276, %s24, 0
        %s278 = scalar_lea.vmem %s2, %s277
        %s279 = smul.u32 8, %s24
        %p280 = scmp.lt.s32.totalorder %s279, 7
        %s281 = scalar_select %p280, %s279, 7
        %s282 = smul.addr %s281, 8
        %s283 = scalar_lea.vmem %s3, %s282
        %s284 = smul.u32 8, %s24
        %p285 = scmp.eq.s32.totalorder %s24, 0
        // Predicated region
        $region41: #{tpu_custom_call.1} parent=39 // pred_check
          %p286 = pneg %p285
        $region42: #{tpu_custom_call.1} parent=39 // pred_check_branch
          %288 = sbr.rel (%p286) target = $region44
        $region43: #{tpu_custom_call.1} parent=39 // pred_region
          %vm289 = vcmask 261120
          %290 = vst.msk [vmem:[#allocation2] sm:$0xff] %vm289, 0.0
        $region44: #{tpu_custom_call.1} parent=39 // pred_fallthru
          _
        %v291 = vld [vmem:[%s271] sm:$0xff]
        %v292 = vld [vmem:[%s275] sm:$0xff]
        %v293 = vld [vmem:[%s275 + $0x8] sm:$0xff]
        %v294 = vld [vmem:[%s275 + $0x10] sm:$0xff]
        %v295 = vld [vmem:[%s275 + $0x18] sm:$0xff]
        %v296 = vld [vmem:[%s278] sm:$0x1]
        %v298 = vperm.slane %v296, 0
        %vm300 = vcmask 261120
        %v302 = vsel %vm300, %v291, 0
        %304 = vmatpush.msra.mxu0 0.0
        %305 = vmatpush.msra.mxu0 0.0
        %306 = vmatpush.msra.mxu0 0.0
        %307 = vmatpush.msra.mxu0 0.0
        %308 = vmatpush.msra.mxu0 0.0
        %309 = vmatpush.msra.mxu0 0.0
        %310 = vmatpush.msra.mxu0 0.0
        %311 = vmatpush.msra.mxu0 0.0
        %312 = vmatpush.msra.mxu0 0.0
        %313 = vmatpush.msra.mxu0 0.0
        %314 = vmatpush.msra.mxu0 0.0
        %315 = vmatpush.msra.mxu0 0.0
        %316 = vmatpush.msra.mxu0 %v295
        %317 = vmatpush.msra.mxu0 %v294
        %318 = vmatpush.msra.mxu0 %v293
        %319 = vmatpush.msra.mxu0 %v292
        %320 = vmatmul.f32.gmra.mxu0 %v302
        %v321 = vpop.f32.mrf.mxu0
        %v322 = vadd.f32 %v298, %v321
        %323 = vdwg.mxu0
        %v324 = vmul.f32 %v322, 0.5
        %v325 = vmul.f32 %v322, 0.044715
        %v326 = vmul.f32 %v325, %v322
        %v327 = vmul.f32 %v326, %v322
        %v328 = vadd.f32 %v322, %v327
        %v329 = vmul.f32 %v328, 0.7978846
        %v330 = vtanh.pop %v329
        %v331 = vadd.f32 %v330, 1.0
        %v332 = vmul.f32 %v324, %v331
        %v333 = vld [vmem:[#allocation2] sm:$0xff]
        %v334 = vld [vmem:[%s283] sm:$0xff]
        %v335 = vld [vmem:[%s283 + $0x8] sm:$0xff]
        %v336 = vld [vmem:[%s283 + $0x10] sm:$0xff]
        %v337 = vld [vmem:[%s283 + $0x18] sm:$0xff]
        %v338 = vld [vmem:[%s283 + $0x20] sm:$0xff]
        %v339 = vld [vmem:[%s283 + $0x28] sm:$0xff]
        %v340 = vld [vmem:[%s283 + $0x30] sm:$0xff]
        %v341 = vld [vmem:[%s283 + $0x38] sm:$0xff]
        %vm342 = vcmask 523264
        %v344 = vsel %vm342, %v332, 0
        %346 = vmatpush.msra.mxu0 0.0
        %347 = vmatpush.msra.mxu0 0.0
        %348 = vmatpush.msra.mxu0 0.0
        %349 = vmatpush.msra.mxu0 0.0
        %350 = vmatpush.msra.mxu0 0.0
        %351 = vmatpush.msra.mxu0 0.0
        %352 = vmatpush.msra.mxu0 0.0
        %353 = vmatpush.msra.mxu0 0.0
        %354 = vmatpush.msra.mxu0 %v341
        %355 = vmatpush.msra.mxu0 %v340
        %356 = vmatpush.msra.mxu0 %v339
        %357 = vmatpush.msra.mxu0 %v338
        %358 = vmatpush.msra.mxu0 %v337
        %359 = vmatpush.msra.mxu0 %v336
        %360 = vmatpush.msra.mxu0 %v335
        %361 = vmatpush.msra.mxu0 %v334
        %362 = vmatmul.f32.gmra.mxu0 %v344
        %v363 = vpop.f32.mrf.mxu0
        %v364 = vadd.f32 0.0, %v363
        %365 = vdwg.mxu0
        %v366 = vadd.f32 %v333, %v364
        %367 = vst.msk [vmem:[#allocation2] sm:$0xff] %vm300, %v366
        // Predicated region
        $region45: #{tpu_custom_call.1} parent=39 // pred_check
          %p368 = pneg %p285
        $region46: #{tpu_custom_call.1} parent=39 // pred_check_branch
          %370 = sbr.rel (%p368) target = $region48
        $region47: #{tpu_custom_call.1} parent=39 // pred_region
          %v371 = vld [vmem:[#allocation2] sm:$0xff]
          %v372 = vld [vmem:[%s4] sm:$0x1]
          %v374 = vperm.slane %v372, 0
          %v376 = vadd.f32 %v371, %v374
          %377 = vst.msk [vmem:[%s267] sm:$0xff] %vm300, %v376
        $region48: #{tpu_custom_call.1} parent=39 // pred_fallthru
          _
        %s378 = sand.u32 %s164, 1
        %s379 = scalar_lea.sflag [#allocation4], %s378
        %s380 = sand.u32 %s164, 1
        %s381 = smul.addr %s380, 8
        %s382 = scalar_lea.vmem [#allocation3], %s381
        // Predicated region
        $region49: #{tpu_custom_call.1} parent=39 // pred_check
          %p383 = pneg %p174
        $region50: #{tpu_custom_call.1} parent=39 // pred_check_branch
          %385 = sbr.rel (%p383) target = $region52
        $region51: #{tpu_custom_call.1} parent=39 // pred_region
          %387 = vsyncadd %s379, 0
          %s388 = smul.addr %s23, 8
          %s389 = scalar_lea.hbm %s5, %s388
          %s391 = sshll.u32 %s382, 4
          %s392 = int_to_ptr.vmem [resolvable:$true] %s391
          %s393 = sshll.u32 %s389, 4
          %s394 = int_to_ptr.hbm [resolvable:$true] %s393
          %396 = dma.vmem_to_hbm [thread:$0]  %s392, 128, %s394, %s379
        $region52: #{tpu_custom_call.1} parent=39 // pred_fallthru
          _
      $region40: #{tpu_custom_call.1} parent=5 // pred_fallthru
        _
      %p397 = scmp.le.s32.totalorder 2, %s14
      // Predicated region
      $region53: #{tpu_custom_call.1} parent=5 // pred_check
        %p398 = pneg %p397
      $region54: #{tpu_custom_call.1} parent=5 // pred_check_branch
        %400 = sbr.rel (%p398) target = $region56
      $region55: #{tpu_custom_call.1} parent=5 // pred_region
        %s401 = ssub.s32 %s14, 2
        // Predicated region
        $region57: #{tpu_custom_call.1} parent=55 // pred_check
          %p402 = pneg %p180
        $region58: #{tpu_custom_call.1} parent=55 // pred_check_branch
          %404 = sbr.rel (%p402) target = $region60
        $region59: #{tpu_custom_call.1} parent=55 // pred_region
          %s405 = sand.u32 %s165, 1
          %s406 = scalar_lea.sflag [#allocation4], %s405
          %s407 = sand.u32 %s165, 1
          %s408 = smul.addr %s407, 8
          %s409 = scalar_lea.vmem [#allocation3], %s408
          %411 = dma.done %s406, 128
        $region60: #{tpu_custom_call.1} parent=55 // pred_fallthru
          _
      $region56: #{tpu_custom_call.1} parent=5 // pred_fallthru
        _
    $region6: #{tpu_custom_call.1} parent=1 // loop_footer
      %s18 = sadd.s32 1, %s14
    $region7: #{tpu_custom_call.1} parent=1 // loop_footer_branch
      %13 = sbr.rel target = $region3
    $region8: #{tpu_custom_call.1} parent=1 // loop_exit
      _
    %412 = vsyncpa [#allocation4], 1
    %s413 = scalar_lea.sflag [#allocation4], 1
    %414 = vsyncpa %s413, 1

</llo_original>
